<compile_context>
chip_gen: v7x
topology: tpu7x:2x2x1
jax: 0.10.0
libtpu: 0.0.40
codegen_flags: <defaults>
</compile_context>

<pallas_src>
import jax
import jax.numpy as jnp
from jax import lax
from jax.experimental import pallas as pl
from jax.experimental.pallas import tpu as pltpu


# --------------------------------------------------------------------------
# Kernels
# --------------------------------------------------------------------------
def _attention_kernel_single(x_ref, w_ref, b_ref, ctx_ref, attn_ref):
    """Common case: the whole sequence is resident per grid step.

    x_ref:    (TB, S, H) VMEM   w_ref: (1, H) VMEM   b_ref: (1,) SMEM
    ctx_ref:  (TB, H)    VMEM   attn_ref: (TB, S) VMEM (lane-dense)
    """
    x = x_ref[...]                       # native dtype, no full-slab upcast
    w = w_ref[...][None]                 # (1, 1, H) broadcasts over (TB, S)
    b = b_ref[0]                         # scalar bias (f32) from SMEM

    # scores[b, s] = sum_h x*w + bias ; f32 accumulation via the reduce
    # (no materialized f32 copy of the (TB, S, H) product).
    scores = jnp.sum(x * w, axis=-1, dtype=jnp.float32) + b          # (TB, S)

    # Softmax over the sequence (lane) axis == torch dim=1.
    m = jnp.max(scores, axis=-1, keepdims=True)                      # (TB, 1)
    e = jnp.exp(scores - m)                                          # (TB, S)
    inv = pl.reciprocal(jnp.sum(e, axis=-1, keepdims=True), approx=False)
    attn = e * inv                                                   # (TB, S) f32

    # context[b, h] = sum_s attn * x, f32 accumulation via the reduce.
    ctx = jnp.sum(x * attn.astype(x.dtype)[:, :, None], axis=1,
                  dtype=jnp.float32)                                 # (TB, H)

    ctx_ref[...] = ctx.astype(ctx_ref.dtype)
    attn_ref[...] = attn.astype(attn_ref.dtype)


def _make_attention_kernel_tiled(seq_len, seq_tile):
    """Long-sequence path: online softmax over sequence tiles (grid axis 1)."""
    needs_mask = (seq_len % seq_tile) != 0

    def kernel(x_ref, w_ref, b_ref, ctx_ref, scores_ref, m_sc, l_sc, acc_sc):
        k = pl.program_id(1)

        @pl.when(k == 0)
        def _init():
            m_sc[...] = jnp.full_like(m_sc, -1e30)   # finite "-inf": no inf-inf NaNs
            l_sc[...] = jnp.zeros_like(l_sc)
            acc_sc[...] = jnp.zeros_like(acc_sc)

        x = x_ref[...]                               # (TB, TS, H) native dtype
        w = w_ref[...][None]                         # (1, 1, H)
        b = b_ref[0]

        s_k = jnp.sum(x * w, axis=-1, dtype=jnp.float32) + b         # (TB, TS)
        if needs_mask:
            col = lax.broadcasted_iota(jnp.int32, s_k.shape, 1) + k * seq_tile
            s_k = jnp.where(col < seq_len, s_k, jnp.float32(-1e30))

        # Raw logits out (per-tile lane-dense block); normalized in the wrapper.
        scores_ref[...] = s_k

        # Online softmax update of running max / denom / weighted-sum.
        m_prev = m_sc[...]
        m_new = jnp.maximum(m_prev, jnp.max(s_k, axis=-1, keepdims=True))
        alpha = jnp.exp(m_prev - m_new)                              # (TB, 1)
        p = jnp.exp(s_k - m_new)                                     # (TB, TS) f32
        l_sc[...] = alpha * l_sc[...] + jnp.sum(p, axis=-1, keepdims=True)
        acc_sc[...] = alpha * acc_sc[...] + jnp.sum(
            x * p.astype(x.dtype)[:, :, None], axis=1, dtype=jnp.float32)
        m_sc[...] = m_new

        @pl.when(k == pl.num_programs(1) - 1)
        def _finalize():
            inv = pl.reciprocal(l_sc[...], approx=False)
            ctx_ref[...] = (acc_sc[...] * inv).astype(ctx_ref.dtype)

    return kernel


# --------------------------------------------------------------------------
# Tiling / VMEM policy
# --------------------------------------------------------------------------
def _vmem_config():
    """Returns (per-block budget, scoped-vmem limit, physical vmem) bytes."""
    try:
        phys = getattr(pltpu.get_tpu_info(), "vmem_capacity_bytes", None)
    except Exception:
        phys = None
    if phys is None:
        phys = 64 * 1024 * 1024                      # conservative (v7x per-TC)
    if phys >= 128 * 1024 * 1024:                    # v5e / v6e: go big
        return 14 * 1024 * 1024, 64 * 1024 * 1024, phys
    return 8 * 1024 * 1024, 48 * 1024 * 1024, phys   # v7x: leave headroom


def _sublane_multiple(dtype):
    # Rows per packed sublane group: 8 for f32, 16 for bf16, 32 for int8/fp8.
    return max(8, 32 // jnp.dtype(dtype).itemsize)


def _round_up(x, m):
    return (x + m - 1) // m * m


def _choose_tiling(B, S, H, dtype, block_budget, seq_block_size=None):
    """Returns (TB, TS, num_seq_tiles)."""
    itemsize = jnp.dtype(dtype).itemsize
    sub = _sublane_multiple(dtype)
    if seq_block_size is not None:
        # Explicit override (tests / tuning).  When it actually tiles S, it
        # must be a multiple of 128 so the per-tile score blocks stay legal.
        ts = seq_block_size
        n = (S + ts - 1) // ts
        assert n == 1 or ts % 128 == 0, "seq_block_size must be a multiple of 128"
        return sub, ts, n
    row_bytes = S * H * itemsize
    if sub * row_bytes <= block_budget:
        tb = (block_budget // row_bytes) // sub * sub
        tb = max(sub, min(tb, _round_up(B, sub)))
        return tb, S, 1
    # Long-sequence path: minimum TB, lane-aligned sequence tiles.
    ts = (block_budget // (sub * H * itemsize)) // 128 * 128
    ts = max(128, ts)
    ts = min(ts, _round_up(S, 128))
    return sub, ts, (S + ts - 1) // ts


# --------------------------------------------------------------------------
# Wrapper
# --------------------------------------------------------------------------
def attention_forward(lstm_output, weight, bias, *, seq_block_size=None):
    """Pallas implementation of the torch Attention.forward.

    Args:
      lstm_output: (B, S, H)
      weight:      (1, H)  (nn.Linear(hidden_dim, 1).weight)
      bias:        (1,)    (nn.Linear bias)
    Returns:
      (context_vector (B, H), attention_weights (B, S, 1))
    """
    B, S, H = lstm_output.shape
    dtype = lstm_output.dtype
    itemsize = jnp.dtype(dtype).itemsize

    block_budget, vmem_limit, phys_vmem = _vmem_config()
    TB, TS, n_seq = _choose_tiling(B, S, H, dtype, block_budget, seq_block_size)
    single = (n_seq == 1) and (TS == S)

    B_pad = _round_up(B, TB)
    S_pad = S if single else n_seq * TS

    x = lstm_output
    if B_pad != B or S_pad != S:
        # Zero-padded batch rows give uniform softmax / zero context; padded
        # sequence positions are masked to -1e30 inside the tiled kernel.
        x = jnp.pad(x, ((0, B_pad - B), (0, S_pad - S), (0, 0)))

    w = weight.reshape(1, H).astype(dtype)       # lane-dense (1, H)
    b = bias.reshape(1).astype(jnp.float32)      # scalar -> SMEM

    # Scale the scoped-VMEM limit to the actual (double-buffered) x block so
    # unusual shapes fail loudly at compile time rather than silently spill.
    x_block_bytes = TB * TS * H * itemsize
    vmem_limit = min(max(vmem_limit, 2 * x_block_bytes + (4 << 20)), phys_vmem)

    if single:
        grid_spec = pltpu.PrefetchScalarGridSpec(
            num_scalar_prefetch=0,
            grid=(B_pad // TB,),
            in_specs=[
                pl.BlockSpec((TB, S, H), lambda i: (i, 0, 0)),          # x slab
                pl.BlockSpec((1, H), lambda i: (0, 0)),                 # weight
                pl.BlockSpec(memory_space=pltpu.MemorySpace.SMEM),      # bias
            ],
            out_specs=[
                pl.BlockSpec((TB, H), lambda i: (i, 0)),                # context
                pl.BlockSpec((TB, S), lambda i: (i, 0)),                # attn
            ],
        )
        ctx, attn2d = pl.pallas_call(
            _attention_kernel_single,
            out_shape=(
                jax.ShapeDtypeStruct((B_pad, H), dtype),
                jax.ShapeDtypeStruct((B_pad, S), dtype),
            ),
            grid_spec=grid_spec,
            compiler_params=pltpu.CompilerParams(
                dimension_semantics=("parallel",),
                vmem_limit_bytes=vmem_limit,
            ),
        )(x, w, b)
        context = ctx[:B]
        attn = attn2d[:B].reshape(B, S, 1)
        return context, attn

    # ---- Long-sequence path: online softmax over S tiles --------------------
    kernel = _make_attention_kernel_tiled(S, TS)
    grid_spec = pltpu.PrefetchScalarGridSpec(
        num_scalar_prefetch=0,
        grid=(B_pad // TB, n_seq),
        in_specs=[
            pl.BlockSpec((TB, TS, H), lambda i, k: (i, k, 0)),          # x tile
            pl.BlockSpec((1, H), lambda i, k: (0, 0)),                  # weight
            pl.BlockSpec(memory_space=pltpu.MemorySpace.SMEM),          # bias
        ],
        out_specs=[
            pl.BlockSpec((TB, H), lambda i, k: (i, 0)),                 # context (resident)
            pl.BlockSpec((TB, TS), lambda i, k: (i, k)),                # raw logits per tile
        ],
        scratch_shapes=[
            pltpu.VMEM((TB, 1), jnp.float32),    # running max
            pltpu.VMEM((TB, 1), jnp.float32),    # running denom
            pltpu.VMEM((TB, H), jnp.float32),    # running weighted sum
        ],
    )
    ctx, scores = pl.pallas_call(
        kernel,
        out_shape=(
            jax.ShapeDtypeStruct((B_pad, H), dtype),
            jax.ShapeDtypeStruct((B_pad, S_pad), jnp.float32),
        ),
        grid_spec=grid_spec,
        compiler_params=pltpu.CompilerParams(
            dimension_semantics=("parallel", "arbitrary"),
            vmem_limit_bytes=vmem_limit,
        ),
    )(x, w, b)
    context = ctx[:B]
    # Final normalization of the logits (tiny, fuses in XLA; negligible HBM
    # traffic relative to the (B, S, H) slab the kernel streams once).
    attn = jax.nn.softmax(scores[:B, :S], axis=-1).astype(dtype).reshape(B, S, 1)
    return context, attn


# --------------------------------------------------------------------------
# Pure-JAX reference (mirrors the PyTorch forward, computed in f32)
# --------------------------------------------------------------------------
def attention_reference(lstm_output, weight, bias):
    x = lstm_output.astype(jnp.float32)
    w = weight.astype(jnp.float32)
    b = bias.astype(jnp.float32)
    scores = jnp.einsum("bsh,oh->bso", x, w) + b     # (B, S, 1)
    attn = jax.nn.softmax(scores, axis=1)
    ctx = jnp.sum(attn * x, axis=1)
    return ctx, attn


if __name__ == "__main__":
    key = jax.random.PRNGKey(0)
    kx, kw, kb, kx2 = jax.random.split(key, 4)

    B, S, H = 2, 8, 32
    bound = 1.0 / (H ** 0.5)
    x = jax.random.normal(kx, (B, S, H), dtype=jnp.float32)
    weight = jax.random.uniform(kw, (1, H), jnp.float32, -bound, bound)
    bias = jax.random.uniform(kb, (1,), jnp.float32, -bound, bound)

    # --- Case 1: small f32, single-tile fast path ---------------------------
    ctx, attn = attention_forward(x, weight, bias)
    ctx, attn = jax.block_until_ready((ctx, attn))
    ctx_r, attn_r = attention_reference(x, weight, bias)
    assert ctx.shape == (B, H) and attn.shape == (B, S, 1)
    assert jnp.allclose(ctx, ctx_r, atol=1e-5, rtol=1e-5)
    assert jnp.allclose(attn, attn_r, atol=1e-5, rtol=1e-5)

    # --- Case 2: bf16 (exercises dtype-aware TB=16 rounding) ----------------
    xb, wb, bb = x.astype(jnp.bfloat16), weight.astype(jnp.bfloat16), bias.astype(jnp.bfloat16)
    ctx_b, attn_b = attention_forward(xb, wb, bb)
    ctx_b, attn_b = jax.block_until_ready((ctx_b, attn_b))
    ctx_br, attn_br = attention_reference(xb, wb, bb)
    assert ctx_b.shape == (B, H) and attn_b.shape == (B, S, 1)
    assert jnp.allclose(ctx_b.astype(jnp.float32), ctx_br, atol=5e-2, rtol=5e-2)
    assert jnp.allclose(attn_b.astype(jnp.float32), attn_br, atol=5e-2, rtol=5e-2)

    # --- Case 3: forced sequence tiling (online-softmax long-S path) --------
    B3, S3 = 2, 300
    x3 = jax.random.normal(kx2, (B3, S3, H), dtype=jnp.float32)
    ctx3, attn3 = attention_forward(x3, weight, bias, seq_block_size=128)
    ctx3, attn3 = jax.block_until_ready((ctx3, attn3))
    ctx3_r, attn3_r = attention_reference(x3, weight, bias)
    assert ctx3.shape == (B3, H) and attn3.shape == (B3, S3, 1)
    assert jnp.allclose(ctx3, ctx3_r, atol=1e-4, rtol=1e-4)
    assert jnp.allclose(attn3, attn3_r, atol=1e-5, rtol=1e-5)

    print("KERNEL_OK")
</pallas_src>

<mosaic_0001>
module attributes {stable_mosaic.version = 11 : i64} {
  func.func @_attention_kernel_single(%arg0: i32, %arg1: memref<8x8x32xf32, #tpu.memory_space<vmem>>, %arg2: memref<1x32xf32, #tpu.memory_space<vmem>>, %arg3: memref<1xf32, #tpu.memory_space<smem>>, %arg4: memref<8x32xf32, #tpu.memory_space<vmem>>, %arg5: memref<8x8xf32, #tpu.memory_space<vmem>>) attributes {dimension_semantics = [#tpu.dimension_semantics<parallel>], iteration_bounds = array<i64: 1>, scalar_prefetch = 0 : i64, scratch_operands = 0 : i64, tpu.core_type = #tpu.core_type<tc>, window_params = [{transform_indices = @transform_0, window_bounds = array<i64: 8, 8, 32>}, {pipeline_mode = #tpu.pipeline_mode<synchronous>, transform_indices = @transform_1, window_bounds = array<i64: 1, 32>}, {transform_indices = @transform_2, window_bounds = array<i64: 1>}, {transform_indices = @transform_3, window_bounds = array<i64: 8, 32>}, {transform_indices = @transform_4, window_bounds = array<i64: 8, 8>}]} {
    %c0 = arith.constant 0 : index
    %c0_0 = arith.constant 0 : index
    %c0_1 = arith.constant 0 : index
    %0 = vector.load %arg1[%c0, %c0_0, %c0_1] : memref<8x8x32xf32, #tpu.memory_space<vmem>>, vector<8x8x32xf32>
    %c0_2 = arith.constant 0 : index
    %c0_3 = arith.constant 0 : index
    %1 = vector.load %arg2[%c0_2, %c0_3] : memref<1x32xf32, #tpu.memory_space<vmem>>, vector<1x32xf32>
    %2 = vector.shape_cast %1 : vector<1x32xf32> to vector<1x1x32xf32>
    %c0_4 = arith.constant 0 : index
    %3 = memref.load %arg3[%c0_4] : memref<1xf32, #tpu.memory_space<smem>>
    %4 = vector.broadcast %2 : vector<1x1x32xf32> to vector<8x8x32xf32>
    %5 = arith.mulf %0, %4 : vector<8x8x32xf32>
    %cst = arith.constant dense<0.000000e+00> : vector<8x8xf32>
    %6 = vector.multi_reduction <add>, %5, %cst [2] : vector<8x8x32xf32> to vector<8x8xf32>
    %7 = vector.broadcast %3 : f32 to vector<8x8xf32>
    %8 = arith.addf %6, %7 : vector<8x8xf32>
    %cst_5 = arith.constant dense<0xFF800000> : vector<8xf32>
    %9 = vector.multi_reduction <maximumf>, %8, %cst_5 [1] : vector<8x8xf32> to vector<8xf32>
    %10 = vector.shape_cast %9 : vector<8xf32> to vector<8x1xf32>
    %11 = vector.broadcast %10 : vector<8x1xf32> to vector<8x8xf32>
    %12 = arith.subf %8, %11 : vector<8x8xf32>
    %13 = math.exp %12 : vector<8x8xf32>
    %cst_6 = arith.constant dense<0.000000e+00> : vector<8xf32>
    %14 = vector.multi_reduction <add>, %13, %cst_6 [1] : vector<8x8xf32> to vector<8xf32>
    %15 = vector.shape_cast %14 : vector<8xf32> to vector<8x1xf32>
    %16 = tpu.reciprocal %15 : vector<8x1xf32> -> vector<8x1xf32>
    %17 = vector.broadcast %16 : vector<8x1xf32> to vector<8x8xf32>
    %18 = arith.mulf %13, %17 : vector<8x8xf32>
    %19 = vector.shape_cast %18 : vector<8x8xf32> to vector<8x8x1xf32>
    %20 = vector.broadcast %19 : vector<8x8x1xf32> to vector<8x8x32xf32>
    %21 = arith.mulf %0, %20 : vector<8x8x32xf32>
    %cst_7 = arith.constant dense<0.000000e+00> : vector<8x32xf32>
    %22 = vector.multi_reduction <add>, %21, %cst_7 [1] : vector<8x8x32xf32> to vector<8x32xf32>
    %c0_8 = arith.constant 0 : index
    %c0_9 = arith.constant 0 : index
    %23 = vector.load %arg4[%c0_8, %c0_9] : memref<8x32xf32, #tpu.memory_space<vmem>>, vector<8x32xf32>
    tpu.vector_store %arg4[%c0_8, %c0_9], %22 {strides = array<i32>} : memref<8x32xf32, #tpu.memory_space<vmem>>, vector<8x32xf32>,
    %c0_10 = arith.constant 0 : index
    %c0_11 = arith.constant 0 : index
    %24 = vector.load %arg5[%c0_10, %c0_11] : memref<8x8xf32, #tpu.memory_space<vmem>>, vector<8x8xf32>
    tpu.vector_store %arg5[%c0_10, %c0_11], %18 {strides = array<i32>} : memref<8x8xf32, #tpu.memory_space<vmem>>, vector<8x8xf32>,
    return
  }
  func.func @transform_0(%arg0: i32) -> (i32, i32, i32) {
    %c0_i32 = arith.constant 0 : i32
    %c0_i32_0 = arith.constant 0 : i32
    %c0_i32_1 = arith.constant 0 : i32
    return %arg0, %c0_i32, %c0_i32_0 : i32, i32, i32
  }
  func.func @transform_1(%arg0: i32) -> (i32, i32) {
    %c0_i32 = arith.constant 0 : i32
    %c0_i32_0 = arith.constant 0 : i32
    %c0_i32_1 = arith.constant 0 : i32
    return %c0_i32, %c0_i32_0 : i32, i32
  }
  func.func @transform_2(%arg0: i32) -> i32 {
    %c0_i32 = arith.constant 0 : i32
    %c0_i32_0 = arith.constant 0 : i32
    return %c0_i32 : i32
  }
  func.func @transform_3(%arg0: i32) -> (i32, i32) {
    %c0_i32 = arith.constant 0 : i32
    %c0_i32_0 = arith.constant 0 : i32
    return %arg0, %c0_i32 : i32, i32
  }
  func.func @transform_4(%arg0: i32) -> (i32, i32) {
    %c0_i32 = arith.constant 0 : i32
    %c0_i32_0 = arith.constant 0 : i32
    return %arg0, %c0_i32 : i32, i32
  }
}

</mosaic_0001>

<llo_original>
// kernel: tpu_custom_call.1
$region0: #{tpu_custom_call.1}
  #allocation0 [shape = 'u32[]', space=smem, size = 0x4, offset = 0x4, fixed_abs, tag = 'smem constant byte address 0x4 - core index']
  #allocation1 [shape = 'u32[144,128]{1,0:T(1,128)}', space=vmem, size = 0x12000, scoped, tag = 'internal scratch']
  #allocation2 [shape = 'f32[1]{0:T(128)S(6)}', space=smem, size = 0x200, scoped, tag = 'scoped memory for tpu_custom_call.1']
  %s0 = inlined_call_operand.hbm [shape: f32[8,8,32], index: 0, kind: input, shape index: {}]
  %s1 = inlined_call_operand.vmem [shape: f32[1,32], index: 1, kind: input, shape index: {}]
  %s2 = inlined_call_operand.<no memory space> [shape: f32[1], index: 2, kind: input, shape index: {}]
  %s3 = inlined_call_operand.hbm [shape: f32[8,32], index: 3, kind: output, shape index: {0}]
  %s4 = inlined_call_operand.hbm [shape: f32[8,8], index: 4, kind: output, shape index: {1}]
  %5 = xla_tuple %s3, %s4
  %s6 = sld [smem:[#allocation0]]
  $region34: #{tpu_custom_call.1} parent=0
    _
  %s8 = ssub.s32 1, %s6
  %s9 = scalar_select 0, %s8, %s6
  %10 = sst [smem:[#allocation2]] %s2
  $region1: #{tpu_custom_call.1} parent=0
    #allocation3 [shape = 'u8[32768]{0}', space=vmem, size = 0x8000, scoped, tag = 'input window, operand 0, single buffered']
    #allocation4 [shape = 's32[1]{0}', space=sflag, size = 0x4, scoped, tag = 'scoped memory for tpu_custom_call.1']
    #allocation5 [shape = 's32[1]{0}', space=sflag, size = 0x4, scoped, tag = 'scoped memory for tpu_custom_call.1']
    #allocation6 [shape = 'u8[4096]{0}', space=vmem, size = 0x1000, scoped, tag = 'output window, operand 0, single buffered']
    #allocation7 [shape = 'u8[4096]{0}', space=vmem, size = 0x1000, scoped, tag = 'output window, operand 1, single buffered']
    #allocation8 [shape = 's32[1]{0}', space=sflag, size = 0x4, scoped, tag = 'scoped memory for tpu_custom_call.1']
    %11 = vsyncpa [#allocation4], 0
    %12 = vsyncpa [#allocation5], 0
    %13 = vsyncpa [#allocation8], 0
    // Predicated region
    $region2: #{tpu_custom_call.1} parent=1 // pred_check
      _
    $region3: #{tpu_custom_call.1} parent=1 // pred_check_branch
      %15 = sbr.rel (0) target = $region5
    $region4: #{tpu_custom_call.1} parent=1 // pred_region
      %s17 = ssub.s32 1024, 1024
      %18 = vsyncadd [#allocation4], %s17
      %s19 = sshll.u32 [#allocation3], 4
      %s20 = int_to_ptr.vmem [resolvable:$true] %s19
      %25 = dma.hbm_to_vmem [thread:$0]  %s0, 1024, %s20, [#allocation4], 128, 128, 8
    $region5: #{tpu_custom_call.1} parent=1 // pred_fallthru
      _
    // Predicated region
    $region6: #{tpu_custom_call.1} parent=1 // pred_check
      _
    $region7: #{tpu_custom_call.1} parent=1 // pred_check_branch
      %27 = sbr.rel (0) target = $region9
    $region8: #{tpu_custom_call.1} parent=1 // pred_region
      _
    $region9: #{tpu_custom_call.1} parent=1 // pred_fallthru
      _
    // Predicated region
    $region10: #{tpu_custom_call.1} parent=1 // pred_check
      _
    $region11: #{tpu_custom_call.1} parent=1 // pred_check_branch
      %29 = sbr.rel (0) target = $region13
    $region12: #{tpu_custom_call.1} parent=1 // pred_region
      _
    $region13: #{tpu_custom_call.1} parent=1 // pred_fallthru
      _
    // Predicated region
    $region14: #{tpu_custom_call.1} parent=1 // pred_check
      _
    $region15: #{tpu_custom_call.1} parent=1 // pred_check_branch
      %31 = sbr.rel (0) target = $region17
    $region16: #{tpu_custom_call.1} parent=1 // pred_region
      %32 = dma.done [#allocation4], 1024
    $region17: #{tpu_custom_call.1} parent=1 // pred_fallthru
      _
    %v33 = vld [vmem:[#allocation3] sm:$0xff]
    %v34 = vld [vmem:[#allocation3 + $0x8] sm:$0xff]
    %v35 = vld [vmem:[#allocation3 + $0x10] sm:$0xff]
    %v36 = vld [vmem:[#allocation3 + $0x18] sm:$0xff]
    %v37 = vld [vmem:[#allocation3 + $0x20] sm:$0xff]
    %v38 = vld [vmem:[#allocation3 + $0x28] sm:$0xff]
    %v39 = vld [vmem:[#allocation3 + $0x30] sm:$0xff]
    %v40 = vld [vmem:[#allocation3 + $0x38] sm:$0xff]
    %v41 = vld [vmem:[%s1] sm:$0x1]
    %s42 = sld [smem:[#allocation2]]
    %v44 = vlaneseq
    %v45 = vshrl.u32 %v44, 7
    %v46 = vsub.s32 0, %v45
    %v47 = vrot.slane %v41, %v46
    %v49 = vmul.f32 %v33, %v47
    %v50 = vmul.f32 %v34, %v47
    %v51 = vmul.f32 %v35, %v47
    %v52 = vmul.f32 %v36, %v47
    %v53 = vmul.f32 %v37, %v47
    %v54 = vmul.f32 %v38, %v47
    %v55 = vmul.f32 %v39, %v47
    %v56 = vmul.f32 %v40, %v47
    %vm57 = vcmask 261120
    %v58 = vsel %vm57, %v49, 0.0
    %59 = vadd.xlane.f32.xlu0 %v58
    %v60 = vpop.xlane.xlu0 %59
    %v61 = vsel %vm57, %v50, 0.0
    %62 = vadd.xlane.f32.xlu0 %v61
    %v63 = vpop.xlane.xlu0 %62
    %v64 = vsel %vm57, %v51, 0.0
    %65 = vadd.xlane.f32.xlu0 %v64
    %v66 = vpop.xlane.xlu0 %65
    %v67 = vsel %vm57, %v52, 0.0
    %68 = vadd.xlane.f32.xlu0 %v67
    %v69 = vpop.xlane.xlu0 %68
    %v70 = vsel %vm57, %v53, 0.0
    %71 = vadd.xlane.f32.xlu0 %v70
    %v72 = vpop.xlane.xlu0 %71
    %v73 = vsel %vm57, %v54, 0.0
    %74 = vadd.xlane.f32.xlu0 %v73
    %v75 = vpop.xlane.xlu0 %74
    %v76 = vsel %vm57, %v55, 0.0
    %77 = vadd.xlane.f32.xlu0 %v76
    %v78 = vpop.xlane.xlu0 %77
    %v79 = vsel %vm57, %v56, 0.0
    %80 = vadd.xlane.f32.xlu0 %v79
    %v81 = vpop.xlane.xlu0 %80
    %v82 = vstv %s42
    %v83 = vadd.f32 %v60, %v82
    %v84 = vadd.f32 %v63, %v82
    %v85 = vadd.f32 %v66, %v82
    %v86 = vadd.f32 %v69, %v82
    %v87 = vadd.f32 %v72, %v82
    %v88 = vadd.f32 %v75, %v82
    %v89 = vadd.f32 %v78, %v82
    %v90 = vadd.f32 %v81, %v82
    %v99 = vlaneseq
    %v100 = vand.u32 %v99, 127
    %v101 = vlaneseq
    %v102 = vshrl.u32 %v101, 7
    %v103 = vsub.s32 %v100, %v102
    %v104 = vrot.slane %v83, %v103
    %v105 = vlaneseq
    %v106 = vshrl.u32 %v105, 7
    %v107 = vsub.s32 %v100, %v106
    %v108 = vrot.slane %v84, %v107
    %v109 = vlaneseq
    %v110 = vshrl.u32 %v109, 7
    %v111 = vsub.s32 %v100, %v110
    %v112 = vrot.slane %v85, %v111
    %v113 = vlaneseq
    %v114 = vshrl.u32 %v113, 7
    %v115 = vsub.s32 %v100, %v114
    %v116 = vrot.slane %v86, %v115
    %v117 = vlaneseq
    %v118 = vshrl.u32 %v117, 7
    %v119 = vsub.s32 %v100, %v118
    %v120 = vrot.slane %v87, %v119
    %v121 = vlaneseq
    %v122 = vshrl.u32 %v121, 7
    %v123 = vsub.s32 %v100, %v122
    %v124 = vrot.slane %v88, %v123
    %v125 = vlaneseq
    %v126 = vshrl.u32 %v125, 7
    %v127 = vsub.s32 %v100, %v126
    %v128 = vrot.slane %v89, %v127
    %v129 = vlaneseq
    %v130 = vshrl.u32 %v129, 7
    %v131 = vsub.s32 %v100, %v130
    %v132 = vrot.slane %v90, %v131
    %vm133 = vcmask 1041409
    %v134 = vsel %vm133, %v108, %v104
    %vm135 = vcmask 1042434
    %v136 = vsel %vm135, %v112, %v134
    %vm137 = vcmask 1043459
    %v138 = vsel %vm137, %v116, %v136
    %vm139 = vcmask 1044484
    %v140 = vsel %vm139, %v120, %v138
    %vm141 = vcmask 1045509
    %v142 = vsel %vm141, %v124, %v140
    %vm143 = vcmask 1046534
    %v144 = vsel %vm143, %v128, %v142
    %vm145 = vcmask 1047559
    %v146 = vsel %vm145, %v132, %v144
    %vm148 = vcmask 64512
    %v149 = vsel %vm148, %v146, -inf
    %150 = vmax.xlane.f32.xlu0 %v149
    %v151 = vpop.xlane.xlu0 %150
    %v153 = vlaneseq
    %v154 = vshrl.u32 %v153, 7
    %v155 = vsub.s32 0, %v154
    %v156 = vrot.slane %v151, %v155
    %v157 = vlaneseq
    %v158 = vshrl.u32 %v157, 7
    %v159 = vsub.s32 1, %v158
    %v160 = vrot.slane %v151, %v159
    %v161 = vlaneseq
    %v162 = vshrl.u32 %v161, 7
    %v163 = vsub.s32 2, %v162
    %v164 = vrot.slane %v151, %v163
    %v165 = vlaneseq
    %v166 = vshrl.u32 %v165, 7
    %v167 = vsub.s32 3, %v166
    %v168 = vrot.slane %v151, %v167
    %v169 = vlaneseq
    %v170 = vshrl.u32 %v169, 7
    %v171 = vsub.s32 4, %v170
    %v172 = vrot.slane %v151, %v171
    %v173 = vlaneseq
    %v174 = vshrl.u32 %v173, 7
    %v175 = vsub.s32 5, %v174
    %v176 = vrot.slane %v151, %v175
    %v177 = vlaneseq
    %v178 = vshrl.u32 %v177, 7
    %v179 = vsub.s32 6, %v178
    %v180 = vrot.slane %v151, %v179
    %v181 = vlaneseq
    %v182 = vshrl.u32 %v181, 7
    %v183 = vsub.s32 7, %v182
    %v184 = vrot.slane %v151, %v183
    %v193 = vsub.f32 %v83, %v156
    %v194 = vsub.f32 %v84, %v160
    %v195 = vsub.f32 %v85, %v164
    %v196 = vsub.f32 %v86, %v168
    %v197 = vsub.f32 %v87, %v172
    %v198 = vsub.f32 %v88, %v176
    %v199 = vsub.f32 %v89, %v180
    %v200 = vsub.f32 %v90, %v184
    %v201 = vmul.f32 %v193, 1.442695
    %v202 = vpow.pop %v201
    %v203 = vmul.f32 %v194, 1.442695
    %v204 = vpow.pop %v203
    %v205 = vmul.f32 %v195, 1.442695
    %v206 = vpow.pop %v205
    %v207 = vmul.f32 %v196, 1.442695
    %v208 = vpow.pop %v207
    %v209 = vmul.f32 %v197, 1.442695
    %v210 = vpow.pop %v209
    %v211 = vmul.f32 %v198, 1.442695
    %v212 = vpow.pop %v211
    %v213 = vmul.f32 %v199, 1.442695
    %v214 = vpow.pop %v213
    %v215 = vmul.f32 %v200, 1.442695
    %v216 = vpow.pop %v215
    %225 = vset.pattern.permute.xlu0 0
    %226 = vperm.xlu0 %225, %v202
    %v227 = vpop.permute.xlu0 %226
    %228 = vset.pattern.permute.xlu0 0
    %229 = vperm.xlu0 %228, %v204
    %v230 = vpop.permute.xlu0 %229
    %231 = vset.pattern.permute.xlu0 0
    %232 = vperm.xlu0 %231, %v206
    %v233 = vpop.permute.xlu0 %232
    %234 = vset.pattern.permute.xlu0 0
    %235 = vperm.xlu0 %234, %v208
    %v236 = vpop.permute.xlu0 %235
    %237 = vset.pattern.permute.xlu0 0
    %238 = vperm.xlu0 %237, %v210
    %v239 = vpop.permute.xlu0 %238
    %240 = vset.pattern.permute.xlu0 0
    %241 = vperm.xlu0 %240, %v212
    %v242 = vpop.permute.xlu0 %241
    %243 = vset.pattern.permute.xlu0 0
    %244 = vperm.xlu0 %243, %v214
    %v245 = vpop.permute.xlu0 %244
    %246 = vset.pattern.permute.xlu0 0
    %247 = vperm.xlu0 %246, %v216
    %v248 = vpop.permute.xlu0 %247
    %v249 = vlaneseq
    %v250 = vshrl.u32 %v249, 7
    %v251 = vsub.s32 %v100, %v250
    %v252 = vrot.slane %v227, %v251
    %v253 = vlaneseq
    %v254 = vshrl.u32 %v253, 7
    %v255 = vsub.s32 %v100, %v254
    %v256 = vrot.slane %v230, %v255
    %v257 = vlaneseq
    %v258 = vshrl.u32 %v257, 7
    %v259 = vsub.s32 %v100, %v258
    %v260 = vrot.slane %v233, %v259
    %v261 = vlaneseq
    %v262 = vshrl.u32 %v261, 7
    %v263 = vsub.s32 %v100, %v262
    %v264 = vrot.slane %v236, %v263
    %v265 = vlaneseq
    %v266 = vshrl.u32 %v265, 7
    %v267 = vsub.s32 %v100, %v266
    %v268 = vrot.slane %v239, %v267
    %v269 = vlaneseq
    %v270 = vshrl.u32 %v269, 7
    %v271 = vsub.s32 %v100, %v270
    %v272 = vrot.slane %v242, %v271
    %v273 = vlaneseq
    %v274 = vshrl.u32 %v273, 7
    %v275 = vsub.s32 %v100, %v274
    %v276 = vrot.slane %v245, %v275
    %v277 = vlaneseq
    %v278 = vshrl.u32 %v277, 7
    %v279 = vsub.s32 %v100, %v278
    %v280 = vrot.slane %v248, %v279
    %v281 = vsel %vm133, %v256, %v252
    %v282 = vsel %vm135, %v260, %v281
    %v283 = vsel %vm137, %v264, %v282
    %v284 = vsel %vm139, %v268, %v283
    %v285 = vsel %vm141, %v272, %v284
    %v286 = vsel %vm143, %v276, %v285
    %v287 = vsel %vm145, %v280, %v286
    %v289 = vsel %vm148, %v287, 0.0
    %290 = vadd.xlane.f32.xlu0 %v289
    %v291 = vpop.xlane.xlu0 %290
    %v292 = vrcp.pop %v291
    %v294 = vlaneseq
    %v295 = vshrl.u32 %v294, 7
    %v296 = vsub.s32 0, %v295
    %v297 = vrot.slane %v292, %v296
    %v298 = vlaneseq
    %v299 = vshrl.u32 %v298, 7
    %v300 = vsub.s32 1, %v299
    %v301 = vrot.slane %v292, %v300
    %v302 = vlaneseq
    %v303 = vshrl.u32 %v302, 7
    %v304 = vsub.s32 2, %v303
    %v305 = vrot.slane %v292, %v304
    %v306 = vlaneseq
    %v307 = vshrl.u32 %v306, 7
    %v308 = vsub.s32 3, %v307
    %v309 = vrot.slane %v292, %v308
    %v310 = vlaneseq
    %v311 = vshrl.u32 %v310, 7
    %v312 = vsub.s32 4, %v311
    %v313 = vrot.slane %v292, %v312
    %v314 = vlaneseq
    %v315 = vshrl.u32 %v314, 7
    %v316 = vsub.s32 5, %v315
    %v317 = vrot.slane %v292, %v316
    %v318 = vlaneseq
    %v319 = vshrl.u32 %v318, 7
    %v320 = vsub.s32 6, %v319
    %v321 = vrot.slane %v292, %v320
    %v322 = vlaneseq
    %v323 = vshrl.u32 %v322, 7
    %v324 = vsub.s32 7, %v323
    %v325 = vrot.slane %v292, %v324
    %v334 = vmul.f32 %v202, %v297
    %v335 = vmul.f32 %v204, %v301
    %v336 = vmul.f32 %v206, %v305
    %v337 = vmul.f32 %v208, %v309
    %v338 = vmul.f32 %v210, %v313
    %v339 = vmul.f32 %v212, %v317
    %v340 = vmul.f32 %v214, %v321
    %v341 = vmul.f32 %v216, %v325
    %343 = vset.pattern.permute.xlu0 0
    %344 = vperm.xlu0 %343, %v334
    %v345 = vpop.permute.xlu0 %344
    %348 = vset.pattern.permute.xlu0 0
    %349 = vperm.xlu0 %348, %v335
    %v350 = vpop.permute.xlu0 %349
    %353 = vset.pattern.permute.xlu0 0
    %354 = vperm.xlu0 %353, %v336
    %v355 = vpop.permute.xlu0 %354
    %358 = vset.pattern.permute.xlu0 0
    %359 = vperm.xlu0 %358, %v337
    %v360 = vpop.permute.xlu0 %359
    %363 = vset.pattern.permute.xlu0 0
    %364 = vperm.xlu0 %363, %v338
    %v365 = vpop.permute.xlu0 %364
    %368 = vset.pattern.permute.xlu0 0
    %369 = vperm.xlu0 %368, %v339
    %v370 = vpop.permute.xlu0 %369
    %373 = vset.pattern.permute.xlu0 0
    %374 = vperm.xlu0 %373, %v340
    %v375 = vpop.permute.xlu0 %374
    %378 = vset.pattern.permute.xlu0 0
    %379 = vperm.xlu0 %378, %v341
    %v380 = vpop.permute.xlu0 %379
    %v382 = vmul.f32 %v33, %v345
    %v383 = vmul.f32 %v34, %v350
    %v384 = vmul.f32 %v35, %v355
    %v385 = vmul.f32 %v36, %v360
    %v386 = vmul.f32 %v37, %v365
    %v387 = vmul.f32 %v38, %v370
    %v388 = vmul.f32 %v39, %v375
    %v389 = vmul.f32 %v40, %v380
    %v390 = vsel %vm57, %v382, 0.0
    %v391 = vrot.slane %v390, 4
    %v392 = vadd.f32 %v390, %v391
    %v393 = vrot.slane %v392, 2
    %v394 = vadd.f32 %v392, %v393
    %v395 = vrot.slane %v394, 1
    %v396 = vadd.f32 %v394, %v395
    %v397 = vsel %vm57, %v383, 0.0
    %v398 = vrot.slane %v397, 4
    %v399 = vadd.f32 %v397, %v398
    %v400 = vrot.slane %v399, 2
    %v401 = vadd.f32 %v399, %v400
    %v402 = vrot.slane %v401, 1
    %v403 = vadd.f32 %v401, %v402
    %v404 = vsel %vm57, %v384, 0.0
    %v405 = vrot.slane %v404, 4
    %v406 = vadd.f32 %v404, %v405
    %v407 = vrot.slane %v406, 2
    %v408 = vadd.f32 %v406, %v407
    %v409 = vrot.slane %v408, 1
    %v410 = vadd.f32 %v408, %v409
    %v411 = vsel %vm57, %v385, 0.0
    %v412 = vrot.slane %v411, 4
    %v413 = vadd.f32 %v411, %v412
    %v414 = vrot.slane %v413, 2
    %v415 = vadd.f32 %v413, %v414
    %v416 = vrot.slane %v415, 1
    %v417 = vadd.f32 %v415, %v416
    %v418 = vsel %vm57, %v386, 0.0
    %v419 = vrot.slane %v418, 4
    %v420 = vadd.f32 %v418, %v419
    %v421 = vrot.slane %v420, 2
    %v422 = vadd.f32 %v420, %v421
    %v423 = vrot.slane %v422, 1
    %v424 = vadd.f32 %v422, %v423
    %v425 = vsel %vm57, %v387, 0.0
    %v426 = vrot.slane %v425, 4
    %v427 = vadd.f32 %v425, %v426
    %v428 = vrot.slane %v427, 2
    %v429 = vadd.f32 %v427, %v428
    %v430 = vrot.slane %v429, 1
    %v431 = vadd.f32 %v429, %v430
    %v432 = vsel %vm57, %v388, 0.0
    %v433 = vrot.slane %v432, 4
    %v434 = vadd.f32 %v432, %v433
    %v435 = vrot.slane %v434, 2
    %v436 = vadd.f32 %v434, %v435
    %v437 = vrot.slane %v436, 1
    %v438 = vadd.f32 %v436, %v437
    %v439 = vsel %vm57, %v389, 0.0
    %v440 = vrot.slane %v439, 4
    %v441 = vadd.f32 %v439, %v440
    %v442 = vrot.slane %v441, 2
    %v443 = vadd.f32 %v441, %v442
    %v444 = vrot.slane %v443, 1
    %v445 = vadd.f32 %v443, %v444
    %v454 = vsel %vm133, %v403, %v396
    %v455 = vsel %vm135, %v410, %v454
    %v456 = vsel %vm137, %v417, %v455
    %v457 = vsel %vm139, %v424, %v456
    %v458 = vsel %vm141, %v431, %v457
    %v459 = vsel %vm143, %v438, %v458
    %v460 = vsel %vm145, %v445, %v459
    %462 = vst.msk [vmem:[#allocation6] sm:$0xff] %vm57, %v460
    %v463 = vlaneseq
    %v464 = vshrl.u32 %v463, 7
    %v465 = vsub.s32 %v100, %v464
    %v466 = vrot.slane %v345, %v465
    %v467 = vlaneseq
    %v468 = vshrl.u32 %v467, 7
    %v469 = vsub.s32 %v100, %v468
    %v470 = vrot.slane %v350, %v469
    %v471 = vlaneseq
    %v472 = vshrl.u32 %v471, 7
    %v473 = vsub.s32 %v100, %v472
    %v474 = vrot.slane %v355, %v473
    %v475 = vlaneseq
    %v476 = vshrl.u32 %v475, 7
    %v477 = vsub.s32 %v100, %v476
    %v478 = vrot.slane %v360, %v477
    %v479 = vlaneseq
    %v480 = vshrl.u32 %v479, 7
    %v481 = vsub.s32 %v100, %v480
    %v482 = vrot.slane %v365, %v481
    %v483 = vlaneseq
    %v484 = vshrl.u32 %v483, 7
    %v485 = vsub.s32 %v100, %v484
    %v486 = vrot.slane %v370, %v485
    %v487 = vlaneseq
    %v488 = vshrl.u32 %v487, 7
    %v489 = vsub.s32 %v100, %v488
    %v490 = vrot.slane %v375, %v489
    %v491 = vlaneseq
    %v492 = vshrl.u32 %v491, 7
    %v493 = vsub.s32 %v100, %v492
    %v494 = vrot.slane %v380, %v493
    %v495 = vsel %vm133, %v470, %v466
    %v496 = vsel %vm135, %v474, %v495
    %v497 = vsel %vm137, %v478, %v496
    %v498 = vsel %vm139, %v482, %v497
    %v499 = vsel %vm141, %v486, %v498
    %v500 = vsel %vm143, %v490, %v499
    %v501 = vsel %vm145, %v494, %v500
    %503 = vst.msk [vmem:[#allocation7] sm:$0xff] %vm148, %v501
    // Predicated region
    $region18: #{tpu_custom_call.1} parent=1 // pred_check
      _
    $region19: #{tpu_custom_call.1} parent=1 // pred_check_branch
      %505 = sbr.rel (0) target = $region21
    $region20: #{tpu_custom_call.1} parent=1 // pred_region
      %s507 = ssub.s32 128, 128
      %508 = vsyncadd [#allocation5], %s507
      %s510 = sshll.u32 [#allocation6], 4
      %s511 = int_to_ptr.vmem [resolvable:$true] %s510
      %513 = dma.vmem_to_hbm [thread:$0]  %s511, 128, %s3, [#allocation5]
    $region21: #{tpu_custom_call.1} parent=1 // pred_fallthru
      _
    // Predicated region
    $region22: #{tpu_custom_call.1} parent=1 // pred_check
      _
    $region23: #{tpu_custom_call.1} parent=1 // pred_check_branch
      %515 = sbr.rel (0) target = $region25
    $region24: #{tpu_custom_call.1} parent=1 // pred_region
      %s517 = ssub.s32 128, 128
      %518 = vsyncadd [#allocation8], %s517
      %s520 = sshll.u32 [#allocation7], 4
      %s521 = int_to_ptr.vmem [resolvable:$true] %s520
      %523 = dma.vmem_to_hbm [thread:$0]  %s521, 128, %s4, [#allocation8]
    $region25: #{tpu_custom_call.1} parent=1 // pred_fallthru
      _
    // Predicated region
    $region26: #{tpu_custom_call.1} parent=1 // pred_check
      _
    $region27: #{tpu_custom_call.1} parent=1 // pred_check_branch
      %525 = sbr.rel (0) target = $region29
    $region28: #{tpu_custom_call.1} parent=1 // pred_region
      %526 = dma.done [#allocation5], 128
    $region29: #{tpu_custom_call.1} parent=1 // pred_fallthru
      _
    // Predicated region
    $region30: #{tpu_custom_call.1} parent=1 // pred_check
      _
    $region31: #{tpu_custom_call.1} parent=1 // pred_check_branch
      %528 = sbr.rel (0) target = $region33
    $region32: #{tpu_custom_call.1} parent=1 // pred_region
      %529 = dma.done [#allocation8], 128
    $region33: #{tpu_custom_call.1} parent=1 // pred_fallthru
      _
    %530 = vsyncpa [#allocation4], 1
    %531 = vsyncpa [#allocation5], 1
    %532 = vsyncpa [#allocation8], 1

</llo_original>
